<compile_context>
chip_gen: v6e
topology: v6e:2x2x1
jax: 0.10.0
libtpu: 0.0.40
codegen_flags: <defaults>
</compile_context>

<pallas_src>
import functools

import jax
import jax.numpy as jnp
import numpy as np
from jax.experimental import pallas as pl
from jax.experimental.pallas import tpu as pltpu

_LANE = 128


def _yolo_kernel(x_ref, grid_ref, boxes_ref, confs_ref, *,
                 sxy_w, sxy_h, anchor_w_n, anchor_h_n):
    """One (batch, HW-tile) grid step.

    x_ref:     (A, 5+C, T)  raw head output slab (native dtype)
    grid_ref:  (2, T)       row0 = (gx + cxy)/W, row1 = (gy + cxy)/H
    boxes_ref: (A, 4, T)    x1 / y1 / x2 / y2 planes
    confs_ref: (A, C, T)    per-class conf * objectness
    """
    f32 = jnp.float32
    A = x_ref.shape[0]

    # Contiguous-slab transcendentals; all math in f32 regardless of input dtype.
    sig_xy = jax.nn.sigmoid(x_ref[:, 0:2, :].astype(f32))    # (A, 2, T)
    exp_wh = jnp.exp(x_ref[:, 2:4, :].astype(f32))           # (A, 2, T)
    sig_obj = jax.nn.sigmoid(x_ref[:, 4:5, :].astype(f32))   # (A, 1, T)
    sig_cls = jax.nn.sigmoid(x_ref[:, 5:, :].astype(f32))    # (A, C, T)

    # Per-(anchor, x|y) scale planes built from *scalar* constants only:
    # tiny (A, 2, 1) selects, broadcast along lanes.  No captured arrays.
    rid = jax.lax.broadcasted_iota(jnp.int32, (A, 2, 1), 1)  # 0 = x/w, 1 = y/h
    aid = jax.lax.broadcasted_iota(jnp.int32, (A, 2, 1), 0)  # anchor index
    sxy_wh = jnp.where(rid == 0, f32(sxy_w), f32(sxy_h))                 # (A,2,1)
    awh = jnp.where(rid == 0, f32(anchor_w_n[0]), f32(anchor_h_n[0]))    # (A,2,1)
    for a in range(1, A):
        a_wh = jnp.where(rid == 0, f32(anchor_w_n[a]), f32(anchor_h_n[a]))
        awh = jnp.where(aid == a, a_wh, awh)

    # Box path: only multiply-adds remain (all /W, /H and the scale_x_y offset
    # were folded host-side into sxy_*, anchor_*_n and the grid input).
    bxy = sig_xy * sxy_wh + grid_ref[...][None]              # (A, 2, T)
    bwh = exp_wh * awh                                       # (A, 2, T)
    b1 = bxy - 0.5 * bwh                                     # [x1, y1]
    b2 = b1 + bwh                                            # [x2, y2]
    boxes_ref[...] = jnp.concatenate([b1, b2], axis=1).astype(boxes_ref.dtype)

    confs_ref[...] = (sig_cls * sig_obj).astype(confs_ref.dtype)


def yolo_layer_pallas(x, *, anchors, anchor_mask, num_classes, num_anchors,
                      stride, scale_x_y=1.0, hw_tile=2048,
                      confs_dtype=jnp.float32, vmem_limit_bytes=None):
    """Eval-mode YoloLayer.forward -> (boxes, confs)."""
    B, Cin, H, W = x.shape
    A = len(anchor_mask)
    NCH = 5 + num_classes
    assert Cin == A * NCH, "channels must equal len(anchor_mask)*(5+num_classes)"

    # Masked anchors normalized by stride and by the feature-map extent.
    anchor_step = len(anchors) // num_anchors
    masked = []
    for m in anchor_mask:
        masked += anchors[m * anchor_step:(m + 1) * anchor_step]
    masked = [a / stride for a in masked]
    anchor_w_n = tuple(float(a) / W for a in masked[0::2])
    anchor_h_n = tuple(float(a) / H for a in masked[1::2])

    # ---- HW tiling: lane-multiple tiles, ragged tail handled by Pallas
    # partial blocks (no host-side padding).
    HW = H * W
    HW_128 = -(-HW // _LANE) * _LANE
    # Double-buffered f32 working-set bytes per lane column (in + outs + grid).
    col_bytes = 8 * (A * NCH + A * num_classes + 4 * A + 2)
    vmem_budget = 12 * 1024 * 1024          # headroom under v5e's 16 MiB default
    max_thw = max(_LANE, (vmem_budget // col_bytes) // _LANE * _LANE)
    thw_req = (int(hw_tile) // _LANE) * _LANE or _LANE
    THW = max(_LANE, min(thw_req, HW_128, max_thw))
    # v7x megacore: keep at least two parallel grid points when possible.
    if B * (-(-HW // THW)) < 2 and HW_128 >= 2 * _LANE:
        THW = min(THW, -(-(HW_128 // 2) // _LANE) * _LANE)
    n_hw = -(-HW // THW)

    # Free, dtype-preserving reshape; cast to f32 happens inside the kernel.
    xr = x.reshape(B, A, NCH, HW)

    # Pre-folded grid offsets, merged into one (2, HW) input:
    #   row0 = (gx - 0.5*(sxy-1))/W, row1 = (gy - 0.5*(sxy-1))/H
    cxy = -0.5 * (float(scale_x_y) - 1.0)
    gx = jnp.tile(jnp.arange(W, dtype=jnp.float32), H)
    gy = jnp.repeat(jnp.arange(H, dtype=jnp.float32), W)
    grid_xy = jnp.stack([(gx + cxy) / float(W), (gy + cxy) / float(H)], axis=0)

    kernel = functools.partial(
        _yolo_kernel,
        sxy_w=float(scale_x_y) / float(W),
        sxy_h=float(scale_x_y) / float(H),
        anchor_w_n=anchor_w_n,
        anchor_h_n=anchor_h_n)

    n_cell = B * A * HW
    cost = pl.CostEstimate(
        flops=int(n_cell * (10 + 2 * num_classes)),
        transcendentals=int(n_cell * (5 + num_classes)),
        bytes_accessed=int(x.size * x.dtype.itemsize
                           + n_cell * 4 * 4
                           + n_cell * num_classes * jnp.dtype(confs_dtype).itemsize
                           + 2 * HW * 4))

    cp_kwargs = dict(dimension_semantics=("parallel", "parallel"))
    if vmem_limit_bytes is not None:
        cp_kwargs["vmem_limit_bytes"] = int(vmem_limit_bytes)

    boxes_k, confs_k = pl.pallas_call(
        kernel,
        out_shape=(jax.ShapeDtypeStruct((B, A, 4, HW), jnp.float32),
                   jax.ShapeDtypeStruct((B, A, num_classes, HW), confs_dtype)),
        grid=(B, n_hw),
        in_specs=[
            pl.BlockSpec((None, A, NCH, THW), lambda b, t: (b, 0, 0, t)),
            pl.BlockSpec((2, THW), lambda b, t: (0, t)),
        ],
        out_specs=(
            pl.BlockSpec((None, A, 4, THW), lambda b, t: (b, 0, 0, t)),
            pl.BlockSpec((None, A, num_classes, THW), lambda b, t: (b, 0, 0, t)),
        ),
        compiler_params=pltpu.CompilerParams(**cp_kwargs),
        cost_estimate=cost,
    )(xr, grid_xy)

    # Glue: restore the exact PyTorch output layouts.  (Kernel keeps HW on the
    # lane axis; emitting last-dim 4/C directly would force lane-sparse stores
    # / risky minor-dim transposes for small C — kept as one XLA transpose.)
    boxes = boxes_k.transpose(0, 1, 3, 2).reshape(B, A * HW, 1, 4)
    confs = confs_k.transpose(0, 1, 3, 2).reshape(B, A * HW, num_classes)
    return boxes, confs


def _yolo_forward_numpy_ref(output, num_classes, masked_anchors, num_anchors,
                            scale_x_y):
    """Pure-numpy replica of yolo_forward for verification."""
    o = np.asarray(output, np.float32)
    batch, _, h, w = o.shape
    nch = 5 + num_classes
    o = o.reshape(batch, num_anchors, nch, h, w)

    def sig(z):
        return 1.0 / (1.0 + np.exp(-z))

    bxy = sig(o[:, :, 0:2]) * scale_x_y - 0.5 * (scale_x_y - 1)
    bwh = np.exp(o[:, :, 2:4])
    det = sig(o[:, :, 4])                 # (b, a, h, w)
    cls = sig(o[:, :, 5:])                # (b, a, c, h, w)

    gx = np.arange(w, dtype=np.float32).reshape(1, 1, 1, w)
    gy = np.arange(h, dtype=np.float32).reshape(1, 1, h, 1)
    aw = np.asarray(masked_anchors[0::2], np.float32).reshape(1, num_anchors, 1, 1)
    ah = np.asarray(masked_anchors[1::2], np.float32).reshape(1, num_anchors, 1, 1)

    bx = (bxy[:, :, 0] + gx) / w
    by = (bxy[:, :, 1] + gy) / h
    bw = bwh[:, :, 0] * aw / w
    bh = bwh[:, :, 1] * ah / h
    bx1 = bx - bw * 0.5
    by1 = by - bh * 0.5
    bx2 = bx1 + bw
    by2 = by1 + bh
    boxes = np.stack([bx1, by1, bx2, by2], axis=-1).reshape(
        batch, num_anchors * h * w, 1, 4)
    confs = (cls.transpose(0, 1, 3, 4, 2) * det[..., None]).reshape(
        batch, num_anchors * h * w, num_classes)
    return boxes, confs


if __name__ == "__main__":
    num_classes = 4
    anchors = [12, 16, 19, 36, 40, 28, 36, 75, 76, 55, 72, 146,
               142, 110, 192, 243, 459, 401]
    num_anchors = 9
    anchor_mask = [0, 1, 2]
    stride = 8
    A = len(anchor_mask)
    Cin = A * (5 + num_classes)          # 27
    anchor_step = len(anchors) // num_anchors

    key = jax.random.PRNGKey(0)
    # Config 1: HW multiple of 128, hw_tile=128 -> 2 HW tiles (exercises tiling
    #           + megacore sharding).
    # Config 2: HW not a multiple of 128, scale_x_y != 1 (exercises partial
    #           blocks / ragged tail + constant folding).
    configs = [
        dict(B=2, H=16, W=16, scale_x_y=1.0, hw_tile=128),
        dict(B=1, H=10, W=10, scale_x_y=1.1, hw_tile=2048),
    ]

    for cfg in configs:
        B, H, W, sxy = cfg["B"], cfg["H"], cfg["W"], cfg["scale_x_y"]
        key, sub = jax.random.split(key)
        x = jax.random.normal(sub, (B, Cin, H, W), dtype=jnp.float32)

        boxes, confs = yolo_layer_pallas(
            x, anchors=anchors, anchor_mask=anchor_mask,
            num_classes=num_classes, num_anchors=num_anchors,
            stride=stride, scale_x_y=sxy, hw_tile=cfg["hw_tile"])
        boxes, confs = jax.block_until_ready((boxes, confs))

        masked = []
        for m in anchor_mask:
            masked += anchors[m * anchor_step:(m + 1) * anchor_step]
        masked = [a / stride for a in masked]
        boxes_ref, confs_ref = _yolo_forward_numpy_ref(
            np.asarray(x), num_classes, masked, A, sxy)

        np.testing.assert_allclose(np.asarray(boxes), boxes_ref,
                                   rtol=1e-3, atol=1e-4)
        np.testing.assert_allclose(np.asarray(confs), confs_ref,
                                   rtol=1e-3, atol=1e-4)

    print("KERNEL_OK")
</pallas_src>

<mosaic_0001>
module attributes {stable_mosaic.version = 11 : i64} {
  func.func @_yolo_kernel(%arg0: i32, %arg1: i32, %arg2: memref<1x3x9x128xf32, #tpu.memory_space<vmem>>, %arg3: memref<2x128xf32, #tpu.memory_space<vmem>>, %arg4: memref<1x3x4x128xf32, #tpu.memory_space<vmem>>, %arg5: memref<1x3x4x128xf32, #tpu.memory_space<vmem>>) attributes {dimension_semantics = [#tpu.dimension_semantics<parallel>, #tpu.dimension_semantics<parallel>], iteration_bounds = array<i64: 2, 2>, scalar_prefetch = 0 : i64, scratch_operands = 0 : i64, tpu.core_type = #tpu.core_type<tc>, window_params = [{transform_indices = @transform_0, window_bounds = array<i64: 1, 3, 9, 128>}, {transform_indices = @transform_1, window_bounds = array<i64: 2, 128>}, {transform_indices = @transform_2, window_bounds = array<i64: 1, 3, 4, 128>}, {transform_indices = @transform_3, window_bounds = array<i64: 1, 3, 4, 128>}]} {
    %c0 = arith.constant 0 : index
    %c0_0 = arith.constant 0 : index
    %c0_1 = arith.constant 0 : index
    %c0_2 = arith.constant 0 : index
    %0 = vector.load %arg2[%c0, %c0_0, %c0_1, %c0_2] : memref<1x3x9x128xf32, #tpu.memory_space<vmem>>, vector<1x3x2x128xf32>
    %1 = vector.shape_cast %0 : vector<1x3x2x128xf32> to vector<3x2x128xf32>
    %2 = arith.negf %1 : vector<3x2x128xf32>
    %3 = math.exp %2 : vector<3x2x128xf32>
    %cst = arith.constant 1.000000e+00 : f32
    %4 = vector.broadcast %cst : f32 to vector<3x2x128xf32>
    %5 = arith.addf %4, %3 : vector<3x2x128xf32>
    %6 = arith.divf %4, %5 : vector<3x2x128xf32>
    %c0_3 = arith.constant 0 : index
    %c0_4 = arith.constant 0 : index
    %c2 = arith.constant 2 : index
    %c0_5 = arith.constant 0 : index
    %7 = vector.load %arg2[%c0_3, %c0_4, %c2, %c0_5] : memref<1x3x9x128xf32, #tpu.memory_space<vmem>>, vector<1x3x2x128xf32>
    %8 = vector.shape_cast %7 : vector<1x3x2x128xf32> to vector<3x2x128xf32>
    %9 = math.exp %8 : vector<3x2x128xf32>
    %c0_6 = arith.constant 0 : index
    %c0_7 = arith.constant 0 : index
    %c4 = arith.constant 4 : index
    %c0_8 = arith.constant 0 : index
    %10 = vector.load %arg2[%c0_6, %c0_7, %c4, %c0_8] : memref<1x3x9x128xf32, #tpu.memory_space<vmem>>, vector<1x3x1x128xf32>
    %11 = vector.shape_cast %10 : vector<1x3x1x128xf32> to vector<3x1x128xf32>
    %12 = arith.negf %11 : vector<3x1x128xf32>
    %13 = math.exp %12 : vector<3x1x128xf32>
    %cst_9 = arith.constant 1.000000e+00 : f32
    %14 = vector.broadcast %cst_9 : f32 to vector<3x1x128xf32>
    %15 = arith.addf %14, %13 : vector<3x1x128xf32>
    %16 = arith.divf %14, %15 : vector<3x1x128xf32>
    %c0_10 = arith.constant 0 : index
    %c0_11 = arith.constant 0 : index
    %c5 = arith.constant 5 : index
    %c0_12 = arith.constant 0 : index
    %17 = vector.load %arg2[%c0_10, %c0_11, %c5, %c0_12] : memref<1x3x9x128xf32, #tpu.memory_space<vmem>>, vector<1x3x4x128xf32>
    %18 = vector.shape_cast %17 : vector<1x3x4x128xf32> to vector<3x4x128xf32>
    %19 = arith.negf %18 : vector<3x4x128xf32>
    %20 = math.exp %19 : vector<3x4x128xf32>
    %cst_13 = arith.constant 1.000000e+00 : f32
    %21 = vector.broadcast %cst_13 : f32 to vector<3x4x128xf32>
    %22 = arith.addf %21, %20 : vector<3x4x128xf32>
    %23 = arith.divf %21, %22 : vector<3x4x128xf32>
    %24 = tpu.iota {dimensions = array<i32: 1>} : vector<3x2x1xi32>
    %25 = tpu.iota {dimensions = array<i32: 0>} : vector<3x2x1xi32>
    %c0_i32 = arith.constant 0 : i32
    %26 = vector.broadcast %c0_i32 : i32 to vector<3x2x1xi32>
    %27 = arith.cmpi eq, %24, %26 : vector<3x2x1xi32>
    %cst_14 = arith.constant 6.250000e-02 : f32
    %cst_15 = arith.constant 6.250000e-02 : f32
    %28 = vector.broadcast %cst_14 : f32 to vector<3x2x1xf32>
    %29 = vector.broadcast %cst_15 : f32 to vector<3x2x1xf32>
    %30 = arith.select %27, %28, %29 : vector<3x2x1xi1>, vector<3x2x1xf32>
    %c0_i32_16 = arith.constant 0 : i32
    %31 = vector.broadcast %c0_i32_16 : i32 to vector<3x2x1xi32>
    %32 = arith.cmpi eq, %24, %31 : vector<3x2x1xi32>
    %cst_17 = arith.constant 9.375000e-02 : f32
    %cst_18 = arith.constant 1.250000e-01 : f32
    %33 = vector.broadcast %cst_17 : f32 to vector<3x2x1xf32>
    %34 = vector.broadcast %cst_18 : f32 to vector<3x2x1xf32>
    %35 = arith.select %32, %33, %34 : vector<3x2x1xi1>, vector<3x2x1xf32>
    %c0_i32_19 = arith.constant 0 : i32
    %36 = vector.broadcast %c0_i32_19 : i32 to vector<3x2x1xi32>
    %37 = arith.cmpi eq, %24, %36 : vector<3x2x1xi32>
    %cst_20 = arith.constant 0.1484375 : f32
    %cst_21 = arith.constant 2.812500e-01 : f32
    %38 = vector.broadcast %cst_20 : f32 to vector<3x2x1xf32>
    %39 = vector.broadcast %cst_21 : f32 to vector<3x2x1xf32>
    %40 = arith.select %37, %38, %39 : vector<3x2x1xi1>, vector<3x2x1xf32>
    %c1_i32 = arith.constant 1 : i32
    %41 = vector.broadcast %c1_i32 : i32 to vector<3x2x1xi32>
    %42 = arith.cmpi eq, %25, %41 : vector<3x2x1xi32>
    %43 = arith.select %42, %40, %35 : vector<3x2x1xi1>, vector<3x2x1xf32>
    %c0_i32_22 = arith.constant 0 : i32
    %44 = vector.broadcast %c0_i32_22 : i32 to vector<3x2x1xi32>
    %45 = arith.cmpi eq, %24, %44 : vector<3x2x1xi32>
    %cst_23 = arith.constant 3.125000e-01 : f32
    %cst_24 = arith.constant 2.187500e-01 : f32
    %46 = vector.broadcast %cst_23 : f32 to vector<3x2x1xf32>
    %47 = vector.broadcast %cst_24 : f32 to vector<3x2x1xf32>
    %48 = arith.select %45, %46, %47 : vector<3x2x1xi1>, vector<3x2x1xf32>
    %c2_i32 = arith.constant 2 : i32
    %49 = vector.broadcast %c2_i32 : i32 to vector<3x2x1xi32>
    %50 = arith.cmpi eq, %25, %49 : vector<3x2x1xi32>
    %51 = arith.select %50, %48, %43 : vector<3x2x1xi1>, vector<3x2x1xf32>
    %52 = vector.broadcast %30 : vector<3x2x1xf32> to vector<3x2x128xf32>
    %53 = arith.mulf %6, %52 : vector<3x2x128xf32>
    %c0_25 = arith.constant 0 : index
    %c0_26 = arith.constant 0 : index
    %54 = vector.load %arg3[%c0_25, %c0_26] : memref<2x128xf32, #tpu.memory_space<vmem>>, vector<2x128xf32>
    %55 = vector.shape_cast %54 : vector<2x128xf32> to vector<1x2x128xf32>
    %56 = vector.broadcast %55 : vector<1x2x128xf32> to vector<3x2x128xf32>
    %57 = arith.addf %53, %56 : vector<3x2x128xf32>
    %58 = vector.broadcast %51 : vector<3x2x1xf32> to vector<3x2x128xf32>
    %59 = arith.mulf %9, %58 : vector<3x2x128xf32>
    %cst_27 = arith.constant 5.000000e-01 : f32
    %60 = vector.broadcast %cst_27 : f32 to vector<3x2x128xf32>
    %61 = arith.mulf %60, %59 : vector<3x2x128xf32>
    %62 = arith.subf %57, %61 : vector<3x2x128xf32>
    %63 = arith.addf %62, %59 : vector<3x2x128xf32>
    %64 = tpu.concatenate %62, %63 in 1 : vector<3x2x128xf32>, vector<3x2x128xf32> -> vector<3x4x128xf32>
    %c0_28 = arith.constant 0 : index
    %c0_29 = arith.constant 0 : index
    %c0_30 = arith.constant 0 : index
    %c0_31 = arith.constant 0 : index
    %65 = vector.load %arg4[%c0_28, %c0_29, %c0_30, %c0_31] : memref<1x3x4x128xf32, #tpu.memory_space<vmem>>, vector<1x3x4x128xf32>
    %66 = vector.shape_cast %65 : vector<1x3x4x128xf32> to vector<3x4x128xf32>
    %67 = vector.shape_cast %64 : vector<3x4x128xf32> to vector<1x3x4x128xf32>
    tpu.vector_store %arg4[%c0_28, %c0_29, %c0_30, %c0_31], %67 {strides = array<i32>} : memref<1x3x4x128xf32, #tpu.memory_space<vmem>>, vector<1x3x4x128xf32>,
    %68 = vector.broadcast %16 : vector<3x1x128xf32> to vector<3x4x128xf32>
    %69 = arith.mulf %23, %68 : vector<3x4x128xf32>
    %c0_32 = arith.constant 0 : index
    %c0_33 = arith.constant 0 : index
    %c0_34 = arith.constant 0 : index
    %c0_35 = arith.constant 0 : index
    %70 = vector.load %arg5[%c0_32, %c0_33, %c0_34, %c0_35] : memref<1x3x4x128xf32, #tpu.memory_space<vmem>>, vector<1x3x4x128xf32>
    %71 = vector.shape_cast %70 : vector<1x3x4x128xf32> to vector<3x4x128xf32>
    %72 = vector.shape_cast %69 : vector<3x4x128xf32> to vector<1x3x4x128xf32>
    tpu.vector_store %arg5[%c0_32, %c0_33, %c0_34, %c0_35], %72 {strides = array<i32>} : memref<1x3x4x128xf32, #tpu.memory_space<vmem>>, vector<1x3x4x128xf32>,
    return
  }
  func.func @transform_0(%arg0: i32, %arg1: i32) -> (i32, i32, i32, i32) {
    %c0_i32 = arith.constant 0 : i32
    %c0_i32_0 = arith.constant 0 : i32
    %c0_i32_1 = arith.constant 0 : i32
    return %arg0, %c0_i32, %c0_i32_0, %arg1 : i32, i32, i32, i32
  }
  func.func @transform_1(%arg0: i32, %arg1: i32) -> (i32, i32) {
    %c0_i32 = arith.constant 0 : i32
    %c0_i32_0 = arith.constant 0 : i32
    return %c0_i32, %arg1 : i32, i32
  }
  func.func @transform_2(%arg0: i32, %arg1: i32) -> (i32, i32, i32, i32) {
    %c0_i32 = arith.constant 0 : i32
    %c0_i32_0 = arith.constant 0 : i32
    %c0_i32_1 = arith.constant 0 : i32
    return %arg0, %c0_i32, %c0_i32_0, %arg1 : i32, i32, i32, i32
  }
  func.func @transform_3(%arg0: i32, %arg1: i32) -> (i32, i32, i32, i32) {
    %c0_i32 = arith.constant 0 : i32
    %c0_i32_0 = arith.constant 0 : i32
    %c0_i32_1 = arith.constant 0 : i32
    return %arg0, %c0_i32, %c0_i32_0, %arg1 : i32, i32, i32, i32
  }
}

</mosaic_0001>

<llo_original>
// kernel: tpu_custom_call.1
$region0: #{tpu_custom_call.1}
  #allocation0 [shape = 'u32[]', space=smem, size = 0x4, offset = 0x4, fixed_abs, tag = 'smem constant byte address 0x4 - core index']
  #allocation1 [shape = 'u32[144,128]{1,0:T(1,128)}', space=vmem, size = 0x12000, scoped, tag = 'internal scratch']
  %s0 = inlined_call_operand.vmem [shape: f32[2,3,9,256], index: 0, kind: input, shape index: {}]
  %s1 = inlined_call_operand.vmem [shape: f32[2,256], index: 1, kind: input, shape index: {}]
  %s2 = inlined_call_operand.hbm [shape: f32[2,3,4,256], index: 2, kind: output, shape index: {0}]
  %s3 = inlined_call_operand.hbm [shape: f32[2,3,4,256], index: 3, kind: output, shape index: {1}]
  %4 = xla_tuple %s2, %s3
  %s5 = sld [smem:[#allocation0]]
  $region87: #{tpu_custom_call.1} parent=0
    _
  %s7 = ssub.s32 1, %s5
  %s8 = scalar_select 0, %s7, %s5
  $region1: #{tpu_custom_call.1} parent=0
    #allocation2 [shape = 'u8[49152]{0}', space=vmem, size = 0xc000, scoped, tag = 'input window, operand 0']
    #allocation3 [shape = 'u8[12288]{0}', space=vmem, size = 0x3000, scoped, tag = 'output window, operand 0']
    #allocation4 [shape = 's32[2]{0}', space=sflag, size = 0x8, scoped, tag = 'scoped memory for tpu_custom_call.1']
    #allocation5 [shape = 'u8[12288]{0}', space=vmem, size = 0x3000, scoped, tag = 'output window, operand 1']
    #allocation6 [shape = 's32[2]{0}', space=sflag, size = 0x8, scoped, tag = 'scoped memory for tpu_custom_call.1']
    %9 = vsyncpa [#allocation4], 0
    %s10 = scalar_lea.sflag [#allocation4], 1
    %11 = vsyncpa %s10, 0
    %12 = vsyncpa [#allocation6], 0
    %s13 = scalar_lea.sflag [#allocation6], 1
    %14 = vsyncpa %s13, 0
    loop: start=0, step=1, limit=6
    $region2: #{tpu_custom_call.1} parent=1 // loop_pre_header
      _
    $region3: #{tpu_custom_call.1} parent=1 // loop_header
      %s16 = sphi 0, %s20
      %p17 = scmp.ge.s32.totalorder %s16, 6
      %s23 = sphi 0, %s35
      %s24 = sphi 0, %s31
      %s25 = sphi 0, %s23
      %s26 = sphi 0, %s24
      %s27 = sphi 0, %s25
      %s28 = sphi 0, %s26
      %s40 = sphi 0, %s42
      %s43 = sphi 0, %s40
      %s44 = sphi 0, %s43
      %s60 = sphi 0, %s44
      %s66 = sphi 0, %s68
      %s69 = sphi 0, %s66
      %s70 = sphi 0, %s69
      %s86 = sphi 0, %s70
      %s94 = sphi 0, %s96
      %s97 = sphi 0, %s94
      %s98 = sphi 0, %s97
      %s114 = sphi 0, %s98
      %s122 = sphi 0, %s124
      %s125 = sphi 0, %s122
      %s126 = sphi 0, %s125
      %s142 = sphi 0, %s126
    $region4: #{tpu_custom_call.1} parent=1 // loop_header_branch
      %19 = sbr.rel (%p17) target = $region8
    $region5: #{tpu_custom_call.1} parent=1 // loop_body
      %s21 = ssub.s32 %s16, 1
      %s22 = ssub.s32 %s16, 2
      %s29 = sadd.s32 1, %s24
      %p30 = scmp.ge.s32.totalorder %s29, 2
      %s31 = scalar_select %p30, 0, %s29
      %s32 = sadd.s32 1, %s23
      %s33 = scalar_select %p30, %s32, %s23
      %p34 = scmp.ge.s32.totalorder %s33, 2
      %s35 = scalar_select %p34, 0, %s33
      %s36 = ssub.s32 %s23, %s35
      %s37 = ssub.s32 %s24, %s31
      %s38 = sor.u32 %s36, %s37
      %p39 = scmp.eq.s32.totalorder %s38, 0
      %s41 = sadd.s32 %s40, 1
      %s42 = scalar_select %p39, %s40, %s41
      %p45 = pneg %p39
      %p46 = scmp.eq.s32.totalorder %s16, 3
      %p47 = por %p45, %p46
      %p48 = scmp.ne.s32.totalorder %s40, %s43
      %p49 = scmp.eq.s32.totalorder %s16, 0
      %p50 = por %p48, %p49
      %p51 = scmp.ne.s32.totalorder %s40, %s43
      %p52 = scmp.eq.s32.totalorder %s21, 3
      %p53 = por %p51, %p52
      %p54 = scmp.ne.s32.totalorder %s43, %s44
      %p55 = scmp.eq.s32.totalorder %s21, 0
      %p56 = por %p54, %p55
      %p57 = scmp.ne.s32.totalorder %s43, %s44
      %p58 = scmp.eq.s32.totalorder %s22, 3
      %p59 = por %p57, %p58
      %p61 = scmp.ne.s32.totalorder %s44, %s60
      %p62 = scmp.eq.s32.totalorder %s22, 0
      %p63 = por %p61, %p62
      %s64 = ssub.s32 %s24, %s31
      %p65 = scmp.eq.s32.totalorder %s64, 0
      %s67 = sadd.s32 %s66, 1
      %s68 = scalar_select %p65, %s66, %s67
      %p71 = pneg %p65
      %p72 = scmp.eq.s32.totalorder %s16, 3
      %p73 = por %p71, %p72
      %p74 = scmp.ne.s32.totalorder %s66, %s69
      %p75 = scmp.eq.s32.totalorder %s16, 0
      %p76 = por %p74, %p75
      %p77 = scmp.ne.s32.totalorder %s66, %s69
      %p78 = scmp.eq.s32.totalorder %s21, 3
      %p79 = por %p77, %p78
      %p80 = scmp.ne.s32.totalorder %s69, %s70
      %p81 = scmp.eq.s32.totalorder %s21, 0
      %p82 = por %p80, %p81
      %p83 = scmp.ne.s32.totalorder %s69, %s70
      %p84 = scmp.eq.s32.totalorder %s22, 3
      %p85 = por %p83, %p84
      %p87 = scmp.ne.s32.totalorder %s70, %s86
      %p88 = scmp.eq.s32.totalorder %s22, 0
      %p89 = por %p87, %p88
      %s90 = ssub.s32 %s23, %s35
      %s91 = ssub.s32 %s24, %s31
      %s92 = sor.u32 %s90, %s91
      %p93 = scmp.eq.s32.totalorder %s92, 0
      %s95 = sadd.s32 %s94, 1
      %s96 = scalar_select %p93, %s94, %s95
      %p99 = pneg %p93
      %p100 = scmp.eq.s32.totalorder %s16, 3
      %p101 = por %p99, %p100
      %p102 = scmp.ne.s32.totalorder %s94, %s97
      %p103 = scmp.eq.s32.totalorder %s16, 0
      %p104 = por %p102, %p103
      %p105 = scmp.ne.s32.totalorder %s94, %s97
      %p106 = scmp.eq.s32.totalorder %s21, 3
      %p107 = por %p105, %p106
      %p108 = scmp.ne.s32.totalorder %s97, %s98
      %p109 = scmp.eq.s32.totalorder %s21, 0
      %p110 = por %p108, %p109
      %p111 = scmp.ne.s32.totalorder %s97, %s98
      %p112 = scmp.eq.s32.totalorder %s22, 3
      %p113 = por %p111, %p112
      %p115 = scmp.ne.s32.totalorder %s98, %s114
      %p116 = scmp.eq.s32.totalorder %s22, 0
      %p117 = por %p115, %p116
      %s118 = ssub.s32 %s23, %s35
      %s119 = ssub.s32 %s24, %s31
      %s120 = sor.u32 %s118, %s119
      %p121 = scmp.eq.s32.totalorder %s120, 0
      %s123 = sadd.s32 %s122, 1
      %s124 = scalar_select %p121, %s122, %s123
      %p127 = pneg %p121
      %p128 = scmp.eq.s32.totalorder %s16, 3
      %p129 = por %p127, %p128
      %p130 = scmp.ne.s32.totalorder %s122, %s125
      %p131 = scmp.eq.s32.totalorder %s16, 0
      %p132 = por %p130, %p131
      %p133 = scmp.ne.s32.totalorder %s122, %s125
      %p134 = scmp.eq.s32.totalorder %s21, 3
      %p135 = por %p133, %p134
      %p136 = scmp.ne.s32.totalorder %s125, %s126
      %p137 = scmp.eq.s32.totalorder %s21, 0
      %p138 = por %p136, %p137
      %p139 = scmp.ne.s32.totalorder %s125, %s126
      %p140 = scmp.eq.s32.totalorder %s22, 3
      %p141 = por %p139, %p140
      %p143 = scmp.ne.s32.totalorder %s126, %s142
      %p144 = scmp.eq.s32.totalorder %s22, 0
      %p145 = por %p143, %p144
      %p146 = scmp.le.s32.totalorder 1, %s16
      %p147 = scmp.lt.s32.totalorder %s16, 5
      %p148 = pnand %p146, %p147
      %p149 = pneg %p148
      // Predicated region
      $region9: #{tpu_custom_call.1} parent=5 // pred_check
        _
      $region10: #{tpu_custom_call.1} parent=5 // pred_check_branch
        %151 = sbr.rel (%p148) target = $region12
      $region11: #{tpu_custom_call.1} parent=5 // pred_region
        %s152 = ssub.s32 %s16, 1
      $region12: #{tpu_custom_call.1} parent=5 // pred_fallthru
        _
      %p153 = scmp.lt.s32.totalorder %s16, 4
      // Predicated region
      $region13: #{tpu_custom_call.1} parent=5 // pred_check
        %p154 = pneg %p153
      $region14: #{tpu_custom_call.1} parent=5 // pred_check_branch
        %156 = sbr.rel (%p154) target = $region16
      $region15: #{tpu_custom_call.1} parent=5 // pred_region
        // Predicated region
        $region17: #{tpu_custom_call.1} parent=15 // pred_check
          %p157 = pneg %p50
        $region18: #{tpu_custom_call.1} parent=15 // pred_check_branch
          %159 = sbr.rel (%p157) target = $region20
        $region19: #{tpu_custom_call.1} parent=15 // pred_region
          %s160 = sand.u32 %s40, 1
          %s161 = sand.u32 %s40, 1
          %s162 = smul.addr %s161, 48
          %s163 = scalar_lea.vmem [#allocation2], %s162
          %s164 = smul.addr %s23, 12
          %s165 = sadd.s32 %s24, %s164
          %s166 = smul.addr %s165, 8
          %s167 = scalar_lea.vmem %s0, %s166
          // Predicated region
          $region21: #{tpu_custom_call.1} parent=19 // pred_check
            _
          $region22: #{tpu_custom_call.1} parent=19 // pred_check_branch
            %169 = sbr.rel (0) target = $region24
          $region23: #{tpu_custom_call.1} parent=19 // pred_region
            // Predicated region
            $region25: #{tpu_custom_call.1} parent=23 // pred_check
              _
            $region26: #{tpu_custom_call.1} parent=23 // pred_check_branch
              %171 = sbr.rel (0) target = $region28
            $region27: #{tpu_custom_call.1} parent=23 // pred_region
              // Predicated region
              $region40: #{tpu_custom_call.1} parent=27 // pred_check
                _
              $region41: #{tpu_custom_call.1} parent=27 // pred_check_branch
                %197 = sbr.rel (0) target = $region43
              $region42: #{tpu_custom_call.1} parent=27 // pred_region
                loop: start=0, step=1, limit=1
                $region44: #{tpu_custom_call.1} parent=42 // loop_pre_header
                  _
                $region45: #{tpu_custom_call.1} parent=42 // loop_header
                  %s199 = sphi 0, %s203
                  %p200 = scmp.ge.s32.totalorder %s199, 1
                  %s204 = sphi %s167, %s167
                  %s205 = sphi %s163, %s163
                $region46: #{tpu_custom_call.1} parent=42 // loop_header_branch
                  %202 = sbr.rel (%p200) target = $region50
                $region47: #{tpu_custom_call.1} parent=42 // loop_body
                  %v206 = vld [vmem:[%s204] sm:$0xff]
                  %207 = vst [vmem:[%s205] sm:$0xff] %v206
                  %v208 = vld [vmem:[%s204 + $0x10] sm:$0xff]
                  %209 = vst [vmem:[%s205 + $0x8] sm:$0xff] %v208
                  %v210 = vld [vmem:[%s204 + $0x20] sm:$0xff]
                  %211 = vst [vmem:[%s205 + $0x10] sm:$0xff] %v210
                  %v212 = vld [vmem:[%s204 + $0x30] sm:$0xff]
                  %213 = vst [vmem:[%s205 + $0x18] sm:$0xff] %v212
                  %v214 = vld [vmem:[%s204 + $0x40] sm:$0xff]
                  %215 = vst [vmem:[%s205 + $0x20] sm:$0xff] %v214
                  %v216 = vld [vmem:[%s204 + $0x50] sm:$0xff]
                  %217 = vst [vmem:[%s205 + $0x28] sm:$0xff] %v216
                $region48: #{tpu_custom_call.1} parent=42 // loop_footer
                  %s203 = sadd.s32 1, %s199
                $region49: #{tpu_custom_call.1} parent=42 // loop_footer_branch
                  %198 = sbr.rel target = $region45
                $region50: #{tpu_custom_call.1} parent=42 // loop_exit
                  _
              $region43: #{tpu_custom_call.1} parent=27 // pred_fallthru
                _
              // Predicated region
              $region51: #{tpu_custom_call.1} parent=27 // pred_check
                _
              $region52: #{tpu_custom_call.1} parent=27 // pred_check_branch
                %219 = sbr.rel target = $region54
              $region53: #{tpu_custom_call.1} parent=27 // pred_region
                _
              $region54: #{tpu_custom_call.1} parent=27 // pred_fallthru
                _
            $region28: #{tpu_custom_call.1} parent=23 // pred_fallthru
              _
            // Predicated region
            $region29: #{tpu_custom_call.1} parent=23 // pred_check
              _
            $region30: #{tpu_custom_call.1} parent=23 // pred_check_branch
              %173 = sbr.rel target = $region32
            $region31: #{tpu_custom_call.1} parent=23 // pred_region
              %s175 = ssub.s32 256, 1
              loop: start=0, step=1, limit=1
              $region33: #{tpu_custom_call.1} parent=31 // loop_pre_header
                _
              $region34: #{tpu_custom_call.1} parent=31 // loop_header
                %s177 = sphi 0, %s181
                %p178 = scmp.ge.s32.totalorder %s177, 1
                %s182 = sphi %s167, %s167
                %s183 = sphi %s163, %s163
              $region35: #{tpu_custom_call.1} parent=31 // loop_header_branch
                %180 = sbr.rel (%p178) target = $region39
              $region36: #{tpu_custom_call.1} parent=31 // loop_body
                %v184 = vld [vmem:[%s182] sm:%s175]
                %185 = vst [vmem:[%s183] sm:%s175] %v184
                %v186 = vld [vmem:[%s182 + $0x10] sm:%s175]
                %187 = vst [vmem:[%s183 + $0x8] sm:%s175] %v186
                %v188 = vld [vmem:[%s182 + $0x20] sm:%s175]
                %189 = vst [vmem:[%s183 + $0x10] sm:%s175] %v188
                %v190 = vld [vmem:[%s182 + $0x30] sm:%s175]
                %191 = vst [vmem:[%s183 + $0x18] sm:%s175] %v190
                %v192 = vld [vmem:[%s182 + $0x40] sm:%s175]
                %193 = vst [vmem:[%s183 + $0x20] sm:%s175] %v192
                %v194 = vld [vmem:[%s182 + $0x50] sm:%s175]
                %195 = vst [vmem:[%s183 + $0x28] sm:%s175] %v194
              $region37: #{tpu_custom_call.1} parent=31 // loop_footer
                %s181 = sadd.s32 1, %s177
              $region38: #{tpu_custom_call.1} parent=31 // loop_footer_branch
                %176 = sbr.rel target = $region34
              $region39: #{tpu_custom_call.1} parent=31 // loop_exit
                _
            $region32: #{tpu_custom_call.1} parent=23 // pred_fallthru
              _
          $region24: #{tpu_custom_call.1} parent=19 // pred_fallthru
            _
          %220 = vnop
        $region20: #{tpu_custom_call.1} parent=15 // pred_fallthru
          _
        // Predicated region
        $region55: #{tpu_custom_call.1} parent=15 // pred_check
          %p221 = pneg %p76
        $region56: #{tpu_custom_call.1} parent=15 // pred_check_branch
          %223 = sbr.rel (%p221) target = $region58
        $region57: #{tpu_custom_call.1} parent=15 // pred_region
          %p224 = scmp.lt.s32.totalorder %s24, 1
          %s225 = scalar_select %p224, %s24, 1
          %s226 = smul.addr %s225, 2
          %s227 = scalar_lea.vmem %s1, %s226
        $region58: #{tpu_custom_call.1} parent=15 // pred_fallthru
          _
      $region16: #{tpu_custom_call.1} parent=5 // pred_fallthru
        _
      %p228 = scmp.le.s32.totalorder 1, %s16
      %p229 = scmp.lt.s32.totalorder %s16, 5
      %p230 = pnand %p228, %p229
      %p231 = pneg %p230
      // Predicated region
      $region59: #{tpu_custom_call.1} parent=5 // pred_check
        _
      $region60: #{tpu_custom_call.1} parent=5 // pred_check_branch
        %233 = sbr.rel (%p230) target = $region62
      $region61: #{tpu_custom_call.1} parent=5 // pred_region
        %s234 = ssub.s32 %s16, 1
        %s235 = sand.u32 %s43, 1
        %s236 = sand.u32 %s43, 1
        %s237 = smul.addr %s236, 48
        %s238 = scalar_lea.vmem [#allocation2], %s237
        // Predicated region
        $region63: #{tpu_custom_call.1} parent=61 // pred_check
          %p239 = pneg %p56
        $region64: #{tpu_custom_call.1} parent=61 // pred_check_branch
          %241 = sbr.rel (%p239) target = $region66
        $region65: #{tpu_custom_call.1} parent=61 // pred_region
          _
        $region66: #{tpu_custom_call.1} parent=61 // pred_fallthru
          _
        %s242 = sand.u32 %s43, 1
        %s243 = sand.u32 %s43, 1
        %s244 = smul.addr %s243, 48
        %s245 = scalar_lea.vmem [#allocation2], %s244
        %p246 = pneg %p56
        %p247 = pneg %p53
        %p248 = scmp.lt.s32.totalorder %s26, 1
        %s249 = scalar_select %p248, %s26, 1
        %s250 = smul.addr %s249, 2
        %s251 = scalar_lea.vmem %s1, %s250
        %p252 = pneg %p82
        %p253 = pneg %p79
        %p254 = pneg %p110
        %p255 = pneg %p107
        %s256 = sand.u32 %s97, 1
        %s257 = scalar_lea.sflag [#allocation4], %s256
        %s258 = sand.u32 %s97, 1
        %s259 = smul.addr %s258, 12
        %s260 = scalar_lea.vmem [#allocation3], %s259
        %p261 = pneg %p138
        %p262 = pneg %p135
        %s263 = sand.u32 %s125, 1
        %s264 = scalar_lea.sflag [#allocation6], %s263
        %s265 = sand.u32 %s125, 1
        %s266 = smul.addr %s265, 12
        %s267 = scalar_lea.vmem [#allocation5], %s266
        %p268 = scmp.lt.s32.totalorder %s26, 1
        %s269 = scalar_select %p268, %s26, 1
        %s270 = smul.addr %s269, 2
        %s271 = scalar_lea.vmem %s1, %s270
        %v272 = vld [vmem:[%s238] sm:$0x3]
        %v273 = vld [vmem:[%s238 + $0x10] sm:$0x3]
        %v274 = vld [vmem:[%s238 + $0x20] sm:$0x3]
        %v275 = vxor.u32 %v272, 2147483648
        %v276 = vxor.u32 %v273, 2147483648
        %v277 = vxor.u32 %v274, 2147483648
        %v278 = vmul.f32 %v275, 1.442695
        %v279 = vpow.pop %v278
        %v280 = vmul.f32 %v276, 1.442695
        %v281 = vpow.pop %v280
        %v282 = vmul.f32 %v277, 1.442695
        %v283 = vpow.pop %v282
        %v284 = vadd.f32 %v279, 1.0
        %v285 = vadd.f32 %v281, 1.0
        %v286 = vadd.f32 %v283, 1.0
        %v287 = vrcp.pop %v284
        %v288 = vmul.f32 1.0, %v287
        %v289 = vrcp.pop %v285
        %v290 = vmul.f32 1.0, %v289
        %v291 = vrcp.pop %v286
        %v292 = vmul.f32 1.0, %v291
        %v293 = vld [vmem:[%s238 + $0x2] sm:$0x3]
        %v294 = vld [vmem:[%s238 + $0x12] sm:$0x3]
        %v295 = vld [vmem:[%s238 + $0x22] sm:$0x3]
        %v296 = vmul.f32 %v293, 1.442695
        %v297 = vpow.pop %v296
        %v298 = vmul.f32 %v294, 1.442695
        %v299 = vpow.pop %v298
        %v300 = vmul.f32 %v295, 1.442695
        %v301 = vpow.pop %v300
        %v302 = vld [vmem:[%s238 + $0x4] sm:$0x1]
        %v303 = vld [vmem:[%s238 + $0x14] sm:$0x1]
        %v304 = vld [vmem:[%s238 + $0x24] sm:$0x1]
        %v305 = vxor.u32 %v302, 2147483648
        %v306 = vxor.u32 %v303, 2147483648
        %v307 = vxor.u32 %v304, 2147483648
        %v308 = vmul.f32 %v305, 1.442695
        %v309 = vpow.pop %v308
        %v310 = vmul.f32 %v306, 1.442695
        %v311 = vpow.pop %v310
        %v312 = vmul.f32 %v307, 1.442695
        %v313 = vpow.pop %v312
        %v314 = vadd.f32 %v309, 1.0
        %v315 = vadd.f32 %v311, 1.0
        %v316 = vadd.f32 %v313, 1.0
        %v317 = vrcp.pop %v314
        %v318 = vmul.f32 1.0, %v317
        %v319 = vrcp.pop %v315
        %v320 = vmul.f32 1.0, %v319
        %v321 = vrcp.pop %v316
        %v322 = vmul.f32 1.0, %v321
        %v323 = vld [vmem:[%s238 + $0x5] sm:$0xf]
        %v324 = vld [vmem:[%s238 + $0x15] sm:$0xf]
        %v325 = vld [vmem:[%s238 + $0x25] sm:$0xf]
        %v326 = vxor.u32 %v323, 2147483648
        %v327 = vxor.u32 %v324, 2147483648
        %v328 = vxor.u32 %v325, 2147483648
        %v329 = vmul.f32 %v326, 1.442695
        %v330 = vpow.pop %v329
        %v331 = vmul.f32 %v327, 1.442695
        %v332 = vpow.pop %v331
        %v333 = vmul.f32 %v328, 1.442695
        %v334 = vpow.pop %v333
        %v335 = vadd.f32 %v330, 1.0
        %v336 = vadd.f32 %v332, 1.0
        %v337 = vadd.f32 %v334, 1.0
        %v338 = vrcp.pop %v335
        %v339 = vmul.f32 1.0, %v338
        %v340 = vrcp.pop %v336
        %v341 = vmul.f32 1.0, %v340
        %v342 = vrcp.pop %v337
        %v343 = vmul.f32 1.0, %v342
        %v344 = vlaneseq
        %v345 = vshrl.u32 %v344, 7
        %vm346 = vcmp.eq.s32.totalorder %v345, 0
        %v347 = vsel %vm346, 0.09375, 0.125
        %v348 = vsel %vm346, 0.1484375, 0.28125
        %v349 = vsel 0, %v348, %v347
        %v350 = vsel 1, %v348, %v347
        %v351 = vsel %vm346, 0.3125, 0.21875
        %v352 = vsel 0, %v351, %v349
        %v353 = vsel 0, %v351, %v350
        %v354 = vsel 1, %v351, %v349
        %v355 = vmul.f32 %v288, 0.0625
        %v356 = vmul.f32 %v290, 0.0625
        %v357 = vmul.f32 %v292, 0.0625
        %v358 = vld [vmem:[%s271] sm:$0x3]
        %v359 = vadd.f32 %v355, %v358
        %v360 = vadd.f32 %v356, %v358
        %v361 = vadd.f32 %v357, %v358
        %v362 = vmul.f32 %v297, %v352
        %v363 = vmul.f32 %v299, %v353
        %v364 = vmul.f32 %v301, %v354
        %v365 = vmul.f32 %v362, 0.5
        %v366 = vmul.f32 %v363, 0.5
        %v367 = vmul.f32 %v364, 0.5
        %v368 = vsub.f32 %v359, %v365
        %v369 = vsub.f32 %v360, %v366
        %v370 = vsub.f32 %v361, %v367
        %v371 = vadd.f32 %v368, %v362
        %v372 = vadd.f32 %v369, %v363
        %v373 = vadd.f32 %v370, %v364
        %v377 = vrot.slane %v371, 6
        %v378 = vrot.slane %v372, 6
        %v379 = vrot.slane %v373, 6
        %vm383 = vcmask 1041408
        %v384 = vsel %vm383, %v368, %v377
        %v385 = vsel %vm383, %v369, %v378
        %v386 = vsel %vm383, %v370, %v379
        %387 = vst [vmem:[%s260] sm:$0xf] %v384
        %388 = vst [vmem:[%s260 + $0x4] sm:$0xf] %v385
        %389 = vst [vmem:[%s260 + $0x8] sm:$0xf] %v386
        %v390 = vlaneseq
        %v391 = vshrl.u32 %v390, 7
        %v392 = vsub.s32 0, %v391
        %v393 = vrot.slane %v318, %v392
        %v394 = vlaneseq
        %v395 = vshrl.u32 %v394, 7
        %v396 = vsub.s32 0, %v395
        %v397 = vrot.slane %v320, %v396
        %v398 = vlaneseq
        %v399 = vshrl.u32 %v398, 7
        %v400 = vsub.s32 0, %v399
        %v401 = vrot.slane %v322, %v400
        %v402 = vmul.f32 %v339, %v393
        %v403 = vmul.f32 %v341, %v397
        %v404 = vmul.f32 %v343, %v401
        %405 = vst [vmem:[%s267] sm:$0xf] %v402
        %406 = vst [vmem:[%s267 + $0x4] sm:$0xf] %v403
        %407 = vst [vmem:[%s267 + $0x8] sm:$0xf] %v404
        %s408 = sand.u32 %s97, 1
        %s409 = scalar_lea.sflag [#allocation4], %s408
        %s410 = sand.u32 %s97, 1
        %s411 = smul.addr %s410, 12
        %s412 = scalar_lea.vmem [#allocation3], %s411
        %s413 = sand.u32 %s125, 1
        %s414 = scalar_lea.sflag [#allocation6], %s413
        %s415 = sand.u32 %s125, 1
        %s416 = smul.addr %s415, 12
        %s417 = scalar_lea.vmem [#allocation5], %s416
        // Predicated region
        $region67: #{tpu_custom_call.1} parent=61 // pred_check
          %p418 = pneg %p107
        $region68: #{tpu_custom_call.1} parent=61 // pred_check_branch
          %420 = sbr.rel (%p418) target = $region70
        $region69: #{tpu_custom_call.1} parent=61 // pred_region
          %s422 = ssub.s32 192, 192
          %423 = vsyncadd %s409, %s422
          %s424 = smul.addr %s25, 6
          %s425 = sadd.s32 %s26, %s424
          %s426 = smul.addr %s425, 64
          %s427 = scalar_lea.hbm %s2, %s426
          %s428 = sshll.u32 %s412, 4
          %s429 = int_to_ptr.vmem [resolvable:$true] %s428
          %434 = dma.vmem_to_hbm [thread:$0]  %s429, 192, %s427, %s409, 64, 128, 4
        $region70: #{tpu_custom_call.1} parent=61 // pred_fallthru
          _
        // Predicated region
        $region71: #{tpu_custom_call.1} parent=61 // pred_check
          %p435 = pneg %p135
        $region72: #{tpu_custom_call.1} parent=61 // pred_check_branch
          %437 = sbr.rel (%p435) target = $region74
        $region73: #{tpu_custom_call.1} parent=61 // pred_region
          %s439 = ssub.s32 192, 192
          %440 = vsyncadd %s414, %s439
          %s441 = smul.addr %s25, 6
          %s442 = sadd.s32 %s26, %s441
          %s443 = smul.addr %s442, 64
          %s444 = scalar_lea.hbm %s3, %s443
          %s445 = sshll.u32 %s417, 4
          %s446 = int_to_ptr.vmem [resolvable:$true] %s445
          %451 = dma.vmem_to_hbm [thread:$0]  %s446, 192, %s444, %s414, 64, 128, 4
        $region74: #{tpu_custom_call.1} parent=61 // pred_fallthru
          _
      $region62: #{tpu_custom_call.1} parent=5 // pred_fallthru
        _
      %p452 = scmp.le.s32.totalorder 2, %s16
      // Predicated region
      $region75: #{tpu_custom_call.1} parent=5 // pred_check
        %p453 = pneg %p452
      $region76: #{tpu_custom_call.1} parent=5 // pred_check_branch
        %455 = sbr.rel (%p453) target = $region78
      $region77: #{tpu_custom_call.1} parent=5 // pred_region
        %s456 = ssub.s32 %s16, 2
        // Predicated region
        $region79: #{tpu_custom_call.1} parent=77 // pred_check
          %p457 = pneg %p113
        $region80: #{tpu_custom_call.1} parent=77 // pred_check_branch
          %459 = sbr.rel (%p457) target = $region82
        $region81: #{tpu_custom_call.1} parent=77 // pred_region
          %s460 = sand.u32 %s98, 1
          %s461 = scalar_lea.sflag [#allocation4], %s460
          %s462 = sand.u32 %s98, 1
          %s463 = smul.addr %s462, 12
          %s464 = scalar_lea.vmem [#allocation3], %s463
          %465 = dma.done %s461, 192
        $region82: #{tpu_custom_call.1} parent=77 // pred_fallthru
          _
        // Predicated region
        $region83: #{tpu_custom_call.1} parent=77 // pred_check
          %p466 = pneg %p141
        $region84: #{tpu_custom_call.1} parent=77 // pred_check_branch
          %468 = sbr.rel (%p466) target = $region86
        $region85: #{tpu_custom_call.1} parent=77 // pred_region
          %s469 = sand.u32 %s126, 1
          %s470 = scalar_lea.sflag [#allocation6], %s469
          %s471 = sand.u32 %s126, 1
          %s472 = smul.addr %s471, 12
          %s473 = scalar_lea.vmem [#allocation5], %s472
          %474 = dma.done %s470, 192
        $region86: #{tpu_custom_call.1} parent=77 // pred_fallthru
          _
      $region78: #{tpu_custom_call.1} parent=5 // pred_fallthru
        _
    $region6: #{tpu_custom_call.1} parent=1 // loop_footer
      %s20 = sadd.s32 1, %s16
    $region7: #{tpu_custom_call.1} parent=1 // loop_footer_branch
      %15 = sbr.rel target = $region3
    $region8: #{tpu_custom_call.1} parent=1 // loop_exit
      _
    %475 = vsyncpa [#allocation4], 1
    %s476 = scalar_lea.sflag [#allocation4], 1
    %477 = vsyncpa %s476, 1
    %478 = vsyncpa [#allocation6], 1
    %s479 = scalar_lea.sflag [#allocation6], 1
    %480 = vsyncpa %s479, 1

</llo_original>
